<compile_context>
chip_gen: v6e
topology: v6e:2x2x1
jax: 0.10.0
libtpu: 0.0.40
codegen_flags: <defaults>
</compile_context>

<pallas_src>
import functools

import jax
import jax.numpy as jnp
import numpy as np
from jax import lax
from jax.experimental import pallas as pl
from jax.experimental.pallas import tpu as pltpu

LANES = 128
TARGET_BLOCK_BYTES = 4 * 1024 * 1024   # HBM bytes per input per grid step
CHUNK_ROWS = 1024                      # in-kernel compute chunk (f32 temps ~512 KiB)
VMEM_LIMIT_BYTES = 32 * 1024 * 1024    # raise v5e's 16 MiB scoped default


def _round_up(x, m):
    return (x + m - 1) // m * m


def _min_sublanes(dtype):
    # f32 needs sublane multiples of 8; sub-32-bit dtypes pack 2x/4x deeper.
    itemsize = jnp.dtype(dtype).itemsize
    return 8 * max(1, 4 // max(1, itemsize))


def _num_tensorcores():
    """2-way core split only where it helps (v7x has 2 TCs; v5e/v6e have 1)."""
    try:
        kind = jax.devices()[0].device_kind.lower()
    except Exception:
        return 1
    # TODO(synk): if a v7x bundle/trace shows "parallel" does not shard the
    # leading axis across both TCs, switch it to pltpu.CORE_PARALLEL.
    return 2 if "v7" in kind else 1


def _pointwise_terms(x, t, from_logits):
    """Per-element (bce, intersection, summation) terms; used in- and out-of-kernel."""
    x = x.astype(jnp.float32)
    t = t.astype(jnp.float32)
    if from_logits:
        # Numerically-stable BCE-with-logits (matches PyTorch):
        #   max(x, 0) - x*t + log(1 + exp(-|x|))
        bce = jnp.maximum(x, 0.0) - x * t + jnp.log1p(jnp.exp(-jnp.abs(x)))
        pred_pos = x >= 0.0            # sigmoid(x) >= 0.5  <=>  x >= 0
    else:
        # PyTorch binary_cross_entropy clamps log terms at -100.
        log_p = jnp.maximum(jnp.log(x), -100.0)
        log_1mp = jnp.maximum(jnp.log(1.0 - x), -100.0)
        bce = -(t * log_p + (1.0 - t) * log_1mp)
        pred_pos = x >= 0.5
    inter = jnp.where(pred_pos, t, 0.0)          # == hard_pred * t
    t_sq = t * t
    summ = jnp.where(pred_pos, 1.0 + t_sq, t_sq)  # == hard_pred**2 + t**2
    return bce, inter, summ


def _jax_partial_sums(x, t, from_logits):
    """(bce_sum, intersection, summation) of a small tail, in plain JAX."""
    if x.size == 0:
        return jnp.zeros((3,), jnp.float32)
    bce, inter, summ = _pointwise_terms(x, t, from_logits)
    return jnp.stack([jnp.sum(bce), jnp.sum(inter), jnp.sum(summ)])


def _dice_bce_kernel(p_ref, t_ref, acc_ref, *, from_logits, rows, tile_rows,
                     chunk_rows, tiles_per_core, exact):
    """Accumulates per-core (8,128) vector partials for (bce, inter, summ).

    acc_ref block: (24, LANES) f32 = 3 stacked (8, LANES) accumulators,
    resident in VMEM across the reduction (last) grid axis.
    """
    c = pl.program_id(0)   # parallel axis (core split)
    i = pl.program_id(1)   # arbitrary axis (reduction over tiles)

    @pl.when(i == 0)
    def _():
        acc_ref[...] = jnp.zeros_like(acc_ref)

    n_chunks = tile_rows // chunk_rows

    def _fold(v):
        # (chunk_rows, LANES) -> (8, LANES): layout-preserving reshape, then
        # a reduce over the leading (vreg) axis => pure elementwise VPU adds.
        return v.reshape(chunk_rows // 8, 8, LANES).sum(axis=0)

    def _accumulate(bce, inter, summ):
        acc_ref[0:8, :] += _fold(bce)
        acc_ref[8:16, :] += _fold(inter)
        acc_ref[16:24, :] += _fold(summ)

    if exact:
        # Every grid tile is fully covered by valid elements: no masking at all.
        def body(j, carry):
            r0 = pl.multiple_of(j * chunk_rows, chunk_rows)
            bce, inter, summ = _pointwise_terms(
                p_ref[pl.ds(r0, chunk_rows), :],
                t_ref[pl.ds(r0, chunk_rows), :], from_logits)
            _accumulate(bce, inter, summ)
            return carry

        lax.fori_loop(0, n_chunks, body, 0)
    else:
        tile_idx = c * tiles_per_core + i
        tile_limit = rows - tile_idx * tile_rows   # valid rows in this tile
        # One iota, hoisted out of the chunk loop; mask is row-granular since
        # the flat prefix is lane-aligned (n_main % 128 == 0).
        row_ids = lax.broadcasted_iota(jnp.int32, (chunk_rows, LANES), 0)

        def body(j, carry):
            r0 = pl.multiple_of(j * chunk_rows, chunk_rows)
            chunk_limit = tile_limit - r0

            # Skip compute entirely for fully-invalid chunks (duplicated
            # core-balancing tiles / past-the-end chunks).
            @pl.when(chunk_limit > 0)
            def _():
                bce, inter, summ = _pointwise_terms(
                    p_ref[pl.ds(r0, chunk_rows), :],
                    t_ref[pl.ds(r0, chunk_rows), :], from_logits)
                valid = row_ids < chunk_limit
                _accumulate(jnp.where(valid, bce, 0.0),
                            jnp.where(valid, inter, 0.0),
                            jnp.where(valid, summ, 0.0))

            return carry

        lax.fori_loop(0, n_chunks, body, 0)


def dice_bce_loss(preds, targets, *, from_logits=True, dice_smooth=1e-5):
    """Pallas implementation of DiceBCELoss.forward (scalar result)."""
    assert preds.shape == targets.shape
    n = preds.size

    # Keep native dtypes; the kernel casts per-chunk in VMEM.
    p = preds.reshape(-1)
    t = targets.reshape(-1)

    # Lane-aligned prefix goes through the kernel; the <128-element tail (if
    # any) is reduced in plain JAX (no full-array pad/concatenate copy).
    n_main = (n // LANES) * LANES
    rows = n_main // LANES
    tail_sums = (_jax_partial_sums(p[n_main:], t[n_main:], from_logits)
                 if n_main < n else jnp.zeros((3,), jnp.float32))

    if rows == 0:
        sums = tail_sums
    else:
        p2 = (p if n_main == n else p[:n_main]).reshape(rows, LANES)
        t2 = (t if n_main == n else t[:n_main]).reshape(rows, LANES)

        num_cores = _num_tensorcores()
        itemsize = max(jnp.dtype(p.dtype).itemsize, jnp.dtype(t.dtype).itemsize)
        sub = max(_min_sublanes(p.dtype), _min_sublanes(t.dtype))

        # Size the DMA block by bytes (>= 4 MiB per input per step), keep the
        # in-kernel compute chunk small so VMEM temporaries stay bounded.
        target_rows = max(sub, TARGET_BLOCK_BYTES // (LANES * itemsize))
        if rows <= target_rows:
            tile_rows = _round_up(rows, sub)
            chunk_rows = min(CHUNK_ROWS, tile_rows)
            tile_rows = _round_up(tile_rows, chunk_rows)
        else:
            chunk_rows = CHUNK_ROWS
            tile_rows = max(chunk_rows, (target_rows // chunk_rows) * chunk_rows)

        num_tiles = pl.cdiv(rows, tile_rows)
        tiles_per_core = pl.cdiv(num_tiles, num_cores)
        # True iff every grid tile is fully covered by valid data (no masking).
        exact = (num_cores * tiles_per_core * tile_rows == rows)

        def _in_map(c, i):
            # Clamp so duplicated (core-balancing) tiles stay in bounds; their
            # contribution is masked out / skipped inside the kernel.
            return (jnp.minimum(c * tiles_per_core + i, num_tiles - 1), 0)

        kernel = functools.partial(
            _dice_bce_kernel,
            from_logits=from_logits,
            rows=rows,
            tile_rows=tile_rows,
            chunk_rows=chunk_rows,
            tiles_per_core=tiles_per_core,
            exact=exact,
        )

        partials = pl.pallas_call(
            kernel,
            out_shape=jax.ShapeDtypeStruct((num_cores * 3 * 8, LANES),
                                           jnp.float32),
            grid_spec=pltpu.PrefetchScalarGridSpec(
                num_scalar_prefetch=0,
                grid=(num_cores, tiles_per_core),
                in_specs=[
                    pl.BlockSpec((tile_rows, LANES), _in_map),
                    pl.BlockSpec((tile_rows, LANES), _in_map),
                ],
                out_specs=pl.BlockSpec((3 * 8, LANES), lambda c, i: (c, 0)),
            ),
            compiler_params=pltpu.CompilerParams(
                dimension_semantics=("parallel", "arbitrary"),
                vmem_limit_bytes=VMEM_LIMIT_BYTES),
        )(p2, t2)

        # Tiny final cross-core / cross-lane reduction in XLA.
        kernel_sums = partials.reshape(num_cores, 3, 8, LANES).sum(axis=(0, 2, 3))
        sums = kernel_sums + tail_sums

    bce_mean = sums[0] / jnp.float32(n)
    dice = (2.0 * sums[1] + dice_smooth) / (sums[2] + dice_smooth)
    return bce_mean + (1.0 - dice)


def _dice_bce_ref(preds, targets, *, from_logits=True, dice_smooth=1e-5):
    """Pure-JAX reference mirroring the PyTorch module (independent formulation)."""
    x = preds.astype(jnp.float32).reshape(-1)
    t = targets.astype(jnp.float32).reshape(-1)
    if from_logits:
        bce = jnp.mean(
            jnp.maximum(x, 0.0) - x * t + jnp.log1p(jnp.exp(-jnp.abs(x))))
        p_hard = (jax.nn.sigmoid(x) >= 0.5).astype(jnp.float32)
    else:
        log_p = jnp.maximum(jnp.log(x), -100.0)
        log_1mp = jnp.maximum(jnp.log(1.0 - x), -100.0)
        bce = jnp.mean(-(t * log_p + (1.0 - t) * log_1mp))
        p_hard = (x >= 0.5).astype(jnp.float32)
    inter = jnp.sum(p_hard * t)
    summ = jnp.sum(p_hard * p_hard + t * t)
    dice = (2.0 * inter + dice_smooth) / (summ + dice_smooth)
    return bce + (1.0 - dice)


if __name__ == "__main__":
    # NCHW inputs, as the PyTorch module would receive from a conv head.
    B, C, H, W = 2, 4, 16, 16
    key = jax.random.PRNGKey(0)
    k_p, k_t = jax.random.split(key)
    preds = jax.random.normal(k_p, (B, C, H, W), dtype=jnp.float32)  # logits
    targets = jax.random.bernoulli(k_t, 0.4, (B, C, H, W)).astype(jnp.float32)

    loss = dice_bce_loss(preds, targets, from_logits=True)
    loss = jax.block_until_ready(loss)

    ref = jax.block_until_ready(_dice_bce_ref(preds, targets, from_logits=True))
    np.testing.assert_allclose(np.asarray(loss), np.asarray(ref),
                               rtol=1e-5, atol=1e-5)
    print("KERNEL_OK")
</pallas_src>

<mosaic_0001>
module attributes {stable_mosaic.version = 11 : i64} {
  func.func @_dice_bce_kernel(%arg0: i32, %arg1: i32, %arg2: memref<16x128xf32, #tpu.memory_space<vmem>>, %arg3: memref<16x128xf32, #tpu.memory_space<vmem>>, %arg4: memref<24x128xf32, #tpu.memory_space<vmem>>) attributes {dimension_semantics = [#tpu.dimension_semantics<parallel>, #tpu.dimension_semantics<arbitrary>], iteration_bounds = array<i64: 1, 1>, scalar_prefetch = 0 : i64, scratch_operands = 0 : i64, tpu.core_type = #tpu.core_type<tc>, window_params = [{transform_indices = @transform_0, window_bounds = array<i64: 16, 128>}, {transform_indices = @transform_1, window_bounds = array<i64: 16, 128>}, {transform_indices = @transform_2, window_bounds = array<i64: 24, 128>}]} {
    %c0_i32 = arith.constant 0 : i32
    %0 = arith.cmpi eq, %arg1, %c0_i32 : i32
    %1 = arith.extui %0 : i1 to i32
    %c0_i32_0 = arith.constant 0 : i32
    %2 = arith.cmpi ne, %1, %c0_i32_0 : i32
    scf.if %2 {
      %cst_20 = arith.constant 0.000000e+00 : f32
      %42 = vector.broadcast %cst_20 : f32 to vector<24x128xf32>
      %c0_21 = arith.constant 0 : index
      %c0_22 = arith.constant 0 : index
      %43 = vector.load %arg4[%c0_21, %c0_22] : memref<24x128xf32, #tpu.memory_space<vmem>>, vector<24x128xf32>
      tpu.vector_store %arg4[%c0_21, %c0_22], %42 {strides = array<i32>} : memref<24x128xf32, #tpu.memory_space<vmem>>, vector<24x128xf32>,
    } else {
    }
    %c0_i32_1 = arith.constant 0 : i32
    %c16_i32 = arith.constant 16 : i32
    %3 = arith.muli %c0_i32_1, %c16_i32 : i32
    %4 = tpu.assume_multiple %3, 16 : i32
    %5 = arith.index_cast %4 : i32 to index
    %c0 = arith.constant 0 : index
    %6 = vector.load %arg2[%5, %c0] : memref<16x128xf32, #tpu.memory_space<vmem>>, vector<16x128xf32>
    %7 = arith.index_cast %4 : i32 to index
    %c0_2 = arith.constant 0 : index
    %8 = vector.load %arg3[%7, %c0_2] : memref<16x128xf32, #tpu.memory_space<vmem>>, vector<16x128xf32>
    %cst = arith.constant 0.000000e+00 : f32
    %9 = vector.broadcast %cst : f32 to vector<16x128xf32>
    %10 = arith.maximumf %6, %9 : vector<16x128xf32>
    %11 = arith.mulf %6, %8 : vector<16x128xf32>
    %12 = arith.subf %10, %11 : vector<16x128xf32>
    %13 = math.absf %6 : vector<16x128xf32>
    %cst_3 = arith.constant 0.000000e+00 : f32
    %14 = vector.broadcast %cst_3 : f32 to vector<16x128xf32>
    %15 = arith.subf %14, %13 : vector<16x128xf32>
    %16 = math.exp %15 : vector<16x128xf32>
    %17 = math.log1p %16 : vector<16x128xf32>
    %18 = arith.addf %12, %17 : vector<16x128xf32>
    %cst_4 = arith.constant 0.000000e+00 : f32
    %19 = vector.broadcast %cst_4 : f32 to vector<16x128xf32>
    %20 = arith.cmpf oge, %6, %19 : vector<16x128xf32>
    %cst_5 = arith.constant 0.000000e+00 : f32
    %21 = vector.broadcast %cst_5 : f32 to vector<16x128xf32>
    %22 = arith.select %20, %8, %21 : vector<16x128xi1>, vector<16x128xf32>
    %23 = arith.mulf %8, %8 : vector<16x128xf32>
    %cst_6 = arith.constant 1.000000e+00 : f32
    %24 = vector.broadcast %cst_6 : f32 to vector<16x128xf32>
    %25 = arith.addf %24, %23 : vector<16x128xf32>
    %26 = arith.select %20, %25, %23 : vector<16x128xi1>, vector<16x128xf32>
    %c0_7 = arith.constant 0 : index
    %c0_8 = arith.constant 0 : index
    %27 = vector.load %arg4[%c0_7, %c0_8] : memref<24x128xf32, #tpu.memory_space<vmem>>, vector<8x128xf32>
    %28 = vector.shape_cast %18 : vector<16x128xf32> to vector<2x8x128xf32>
    %cst_9 = arith.constant dense<0.000000e+00> : vector<8x128xf32>
    %29 = vector.multi_reduction <add>, %28, %cst_9 [0] : vector<2x8x128xf32> to vector<8x128xf32>
    %30 = arith.addf %27, %29 : vector<8x128xf32>
    %c0_10 = arith.constant 0 : index
    %c0_11 = arith.constant 0 : index
    %31 = vector.load %arg4[%c0_10, %c0_11] : memref<24x128xf32, #tpu.memory_space<vmem>>, vector<8x128xf32>
    tpu.vector_store %arg4[%c0_10, %c0_11], %30 {strides = array<i32>} : memref<24x128xf32, #tpu.memory_space<vmem>>, vector<8x128xf32>,
    %c8 = arith.constant 8 : index
    %c0_12 = arith.constant 0 : index
    %32 = vector.load %arg4[%c8, %c0_12] : memref<24x128xf32, #tpu.memory_space<vmem>>, vector<8x128xf32>
    %33 = vector.shape_cast %22 : vector<16x128xf32> to vector<2x8x128xf32>
    %cst_13 = arith.constant dense<0.000000e+00> : vector<8x128xf32>
    %34 = vector.multi_reduction <add>, %33, %cst_13 [0] : vector<2x8x128xf32> to vector<8x128xf32>
    %35 = arith.addf %32, %34 : vector<8x128xf32>
    %c8_14 = arith.constant 8 : index
    %c0_15 = arith.constant 0 : index
    %36 = vector.load %arg4[%c8_14, %c0_15] : memref<24x128xf32, #tpu.memory_space<vmem>>, vector<8x128xf32>
    tpu.vector_store %arg4[%c8_14, %c0_15], %35 {strides = array<i32>} : memref<24x128xf32, #tpu.memory_space<vmem>>, vector<8x128xf32>,
    %c16 = arith.constant 16 : index
    %c0_16 = arith.constant 0 : index
    %37 = vector.load %arg4[%c16, %c0_16] : memref<24x128xf32, #tpu.memory_space<vmem>>, vector<8x128xf32>
    %38 = vector.shape_cast %26 : vector<16x128xf32> to vector<2x8x128xf32>
    %cst_17 = arith.constant dense<0.000000e+00> : vector<8x128xf32>
    %39 = vector.multi_reduction <add>, %38, %cst_17 [0] : vector<2x8x128xf32> to vector<8x128xf32>
    %40 = arith.addf %37, %39 : vector<8x128xf32>
    %c16_18 = arith.constant 16 : index
    %c0_19 = arith.constant 0 : index
    %41 = vector.load %arg4[%c16_18, %c0_19] : memref<24x128xf32, #tpu.memory_space<vmem>>, vector<8x128xf32>
    tpu.vector_store %arg4[%c16_18, %c0_19], %40 {strides = array<i32>} : memref<24x128xf32, #tpu.memory_space<vmem>>, vector<8x128xf32>,
    %c1_i32 = arith.constant 1 : i32
    return
  }
  func.func @transform_0(%arg0: i32, %arg1: i32) -> (i32, i32) {
    %c1_i32 = arith.constant 1 : i32
    %0 = arith.muli %arg0, %c1_i32 : i32
    %1 = arith.addi %0, %arg1 : i32
    %c0_i32 = arith.constant 0 : i32
    %2 = arith.minsi %1, %c0_i32 : i32
    %c0_i32_0 = arith.constant 0 : i32
    %c0_i32_1 = arith.constant 0 : i32
    return %2, %c0_i32_0 : i32, i32
  }
  func.func @transform_1(%arg0: i32, %arg1: i32) -> (i32, i32) {
    %c1_i32 = arith.constant 1 : i32
    %0 = arith.muli %arg0, %c1_i32 : i32
    %1 = arith.addi %0, %arg1 : i32
    %c0_i32 = arith.constant 0 : i32
    %2 = arith.minsi %1, %c0_i32 : i32
    %c0_i32_0 = arith.constant 0 : i32
    %c0_i32_1 = arith.constant 0 : i32
    return %2, %c0_i32_0 : i32, i32
  }
  func.func @transform_2(%arg0: i32, %arg1: i32) -> (i32, i32) {
    %c0_i32 = arith.constant 0 : i32
    %c0_i32_0 = arith.constant 0 : i32
    return %arg0, %c0_i32 : i32, i32
  }
}

</mosaic_0001>

<llo_original>
// kernel: tpu_custom_call.1
$region0: #{tpu_custom_call.1}
  #allocation0 [shape = 'u32[]', space=smem, size = 0x4, offset = 0x4, fixed_abs, tag = 'smem constant byte address 0x4 - core index']
  #allocation1 [shape = 'u32[144,128]{1,0:T(1,128)}', space=vmem, size = 0x12000, scoped, tag = 'internal scratch']
  %s0 = inlined_call_operand.hbm [shape: f32[16,128], index: 0, kind: input, shape index: {}]
  %s1 = inlined_call_operand.hbm [shape: f32[16,128], index: 1, kind: input, shape index: {}]
  %s2 = inlined_call_operand.hbm [shape: f32[24,128], index: 2, kind: output, shape index: {}]
  %s3 = sld [smem:[#allocation0]]
  $region30: #{tpu_custom_call.1} parent=0
    _
  %s5 = ssub.s32 1, %s3
  %s6 = scalar_select 0, %s5, %s3
  $region1: #{tpu_custom_call.1} parent=0
    #allocation2 [shape = 'u8[8192]{0}', space=vmem, size = 0x2000, scoped, tag = 'input window, operand 0, single buffered']
    #allocation3 [shape = 's32[1]{0}', space=sflag, size = 0x4, scoped, tag = 'scoped memory for tpu_custom_call.1']
    #allocation4 [shape = 's32[1]{0}', space=sflag, size = 0x4, scoped, tag = 'scoped memory for tpu_custom_call.1']
    #allocation5 [shape = 'u8[8192]{0}', space=vmem, size = 0x2000, scoped, tag = 'input window, operand 1, single buffered']
    #allocation6 [shape = 's32[1]{0}', space=sflag, size = 0x4, scoped, tag = 'scoped memory for tpu_custom_call.1']
    #allocation7 [shape = 'u8[12288]{0}', space=vmem, size = 0x3000, scoped, tag = 'output window, operand 0, single buffered']
    %7 = vsyncpa [#allocation3], 0
    %8 = vsyncpa [#allocation6], 0
    %9 = vsyncpa [#allocation4], 0
    // Predicated region
    $region2: #{tpu_custom_call.1} parent=1 // pred_check
      _
    $region3: #{tpu_custom_call.1} parent=1 // pred_check_branch
      %11 = sbr.rel (0) target = $region5
    $region4: #{tpu_custom_call.1} parent=1 // pred_region
      %s12 = sadd.s32 0, 0
      %p13 = scmp.lt.s32.totalorder %s12, 0
      %s14 = scalar_select %p13, %s12, 0
      %s15 = smul.u32 2, %s14
      %s17 = ssub.s32 256, 256
      %18 = vsyncadd [#allocation3], %s17
      %s19 = smul.addr %s15, 128
      %s20 = scalar_lea.hbm %s0, %s19
      %s21 = sshll.u32 [#allocation2], 4
      %s22 = int_to_ptr.vmem [resolvable:$true] %s21
      %27 = dma.hbm_to_vmem [thread:$0]  %s20, 256, %s22, [#allocation3], 128, 128, 8
    $region5: #{tpu_custom_call.1} parent=1 // pred_fallthru
      _
    // Predicated region
    $region6: #{tpu_custom_call.1} parent=1 // pred_check
      _
    $region7: #{tpu_custom_call.1} parent=1 // pred_check_branch
      %29 = sbr.rel (0) target = $region9
    $region8: #{tpu_custom_call.1} parent=1 // pred_region
      %s30 = sadd.s32 0, 0
      %p31 = scmp.lt.s32.totalorder %s30, 0
      %s32 = scalar_select %p31, %s30, 0
      %s33 = smul.u32 2, %s32
      %s35 = ssub.s32 256, 256
      %36 = vsyncadd [#allocation6], %s35
      %s37 = smul.addr %s33, 128
      %s38 = scalar_lea.hbm %s1, %s37
      %s39 = sshll.u32 [#allocation5], 4
      %s40 = int_to_ptr.vmem [resolvable:$true] %s39
      %45 = dma.hbm_to_vmem [thread:$0]  %s38, 256, %s40, [#allocation6], 128, 128, 8
    $region9: #{tpu_custom_call.1} parent=1 // pred_fallthru
      _
    // Predicated region
    $region10: #{tpu_custom_call.1} parent=1 // pred_check
      _
    $region11: #{tpu_custom_call.1} parent=1 // pred_check_branch
      %47 = sbr.rel (0) target = $region13
    $region12: #{tpu_custom_call.1} parent=1 // pred_region
      %48 = dma.done [#allocation3], 256
    $region13: #{tpu_custom_call.1} parent=1 // pred_fallthru
      _
    // Predicated region
    $region14: #{tpu_custom_call.1} parent=1 // pred_check
      _
    $region15: #{tpu_custom_call.1} parent=1 // pred_check_branch
      %50 = sbr.rel (0) target = $region17
    $region16: #{tpu_custom_call.1} parent=1 // pred_region
      %51 = dma.done [#allocation6], 256
    $region17: #{tpu_custom_call.1} parent=1 // pred_fallthru
      _
    %s52 = sadd.s32 0, 0
    %p53 = scmp.lt.s32.totalorder %s52, 0
    %s54 = scalar_select %p53, %s52, 0
    %s55 = smul.u32 2, %s54
    %s56 = sadd.s32 0, 0
    %p57 = scmp.lt.s32.totalorder %s56, 0
    %s58 = scalar_select %p57, %s56, 0
    %s59 = smul.u32 2, %s58
    %p60 = scmp.eq.s32.totalorder 0, 0
    // Predicated region
    $region18: #{tpu_custom_call.1} parent=1 // pred_check
      %p61 = pneg %p60
    $region19: #{tpu_custom_call.1} parent=1 // pred_check_branch
      %63 = sbr.rel (%p61) target = $region21
    $region20: #{tpu_custom_call.1} parent=1 // pred_region
      %64 = vst [vmem:[#allocation7] sm:$0xff] 0.0
      %65 = vst [vmem:[#allocation7 + $0x8] sm:$0xff] 0.0
      %66 = vst [vmem:[#allocation7 + $0x10] sm:$0xff] 0.0
    $region21: #{tpu_custom_call.1} parent=1 // pred_fallthru
      _
    %v67 = vld [vmem:[#allocation2] sm:$0xff]
    %v68 = vld [vmem:[#allocation2 + $0x8] sm:$0xff]
    %v69 = vld [vmem:[#allocation5] sm:$0xff]
    %v70 = vld [vmem:[#allocation5 + $0x8] sm:$0xff]
    %v71 = vmax.f32 %v67, 0.0
    %v72 = vmax.f32 %v68, 0.0
    %v73 = vmul.f32 %v67, %v69
    %v74 = vmul.f32 %v68, %v70
    %v75 = vsub.f32 %v71, %v73
    %v76 = vsub.f32 %v72, %v74
    %v77 = vand.u32 2147483647, %v67
    %v78 = vand.u32 2147483647, %v68
    %v79 = vsub.f32 0.0, %v77
    %v80 = vsub.f32 0.0, %v78
    %v81 = vmul.f32 %v79, 1.442695
    %v82 = vpow.pop %v81
    %v83 = vmul.f32 %v80, 1.442695
    %v84 = vpow.pop %v83
    %v85 = vadd.f32 %v82, 1.0
    %v86 = vlog2.pop %v85
    %v87 = vmul.f32 %v86, 0.6931472
    %v88 = vmul.f32 -0.5, %v82
    %v89 = vadd.f32 %v88, 1.0
    %v90 = vmul.f32 %v89, %v82
    %v91 = vand.u32 2147483647, %v82
    %vm92 = vcmp.lt.f32.partialorder %v91, 0.0004427343
    %v93 = vsel %vm92, %v90, %v87
    %v94 = vadd.f32 %v84, 1.0
    %v95 = vlog2.pop %v94
    %v96 = vmul.f32 %v95, 0.6931472
    %v97 = vmul.f32 -0.5, %v84
    %v98 = vadd.f32 %v97, 1.0
    %v99 = vmul.f32 %v98, %v84
    %v100 = vand.u32 2147483647, %v84
    %vm101 = vcmp.lt.f32.partialorder %v100, 0.0004427343
    %v102 = vsel %vm101, %v99, %v96
    %v103 = vadd.f32 %v75, %v93
    %v104 = vadd.f32 %v76, %v102
    %vm105 = vcmp.ge.f32.partialorder %v67, 0.0
    %vm106 = vcmp.ge.f32.partialorder %v68, 0.0
    %v107 = vsel %vm105, %v69, 0.0
    %v108 = vsel %vm106, %v70, 0.0
    %v109 = vmul.f32 %v69, %v69
    %v110 = vmul.f32 %v70, %v70
    %v111 = vadd.f32 %v109, 1.0
    %v112 = vadd.f32 %v110, 1.0
    %v113 = vsel %vm105, %v111, %v109
    %v114 = vsel %vm106, %v112, %v110
    %v115 = vld [vmem:[#allocation7] sm:$0xff]
    %v116 = vadd.f32 %v103, %v104
    %v117 = vadd.f32 %v115, %v116
    %118 = vst [vmem:[#allocation7] sm:$0xff] %v117
    %v119 = vld [vmem:[#allocation7 + $0x8] sm:$0xff]
    %v120 = vadd.f32 %v107, %v108
    %v121 = vadd.f32 %v119, %v120
    %122 = vst [vmem:[#allocation7 + $0x8] sm:$0xff] %v121
    %v123 = vld [vmem:[#allocation7 + $0x10] sm:$0xff]
    %v124 = vadd.f32 %v113, %v114
    %v125 = vadd.f32 %v123, %v124
    %126 = vst [vmem:[#allocation7 + $0x10] sm:$0xff] %v125
    // Predicated region
    $region22: #{tpu_custom_call.1} parent=1 // pred_check
      _
    $region23: #{tpu_custom_call.1} parent=1 // pred_check_branch
      %128 = sbr.rel (0) target = $region25
    $region24: #{tpu_custom_call.1} parent=1 // pred_region
      %s130 = ssub.s32 384, 384
      %131 = vsyncadd [#allocation4], %s130
      %s132 = sshll.u32 [#allocation7], 4
      %s133 = int_to_ptr.vmem [resolvable:$true] %s132
      %138 = dma.vmem_to_hbm [thread:$0]  %s133, 384, %s2, [#allocation4], 128, 128, 8
    $region25: #{tpu_custom_call.1} parent=1 // pred_fallthru
      _
    // Predicated region
    $region26: #{tpu_custom_call.1} parent=1 // pred_check
      _
    $region27: #{tpu_custom_call.1} parent=1 // pred_check_branch
      %140 = sbr.rel (0) target = $region29
    $region28: #{tpu_custom_call.1} parent=1 // pred_region
      %141 = dma.done [#allocation4], 384
    $region29: #{tpu_custom_call.1} parent=1 // pred_fallthru
      _
    %142 = vsyncpa [#allocation3], 1
    %143 = vsyncpa [#allocation6], 1
    %144 = vsyncpa [#allocation4], 1

</llo_original>
